<compile_context>
chip_gen: v7x
topology: tpu7x:2x2x1
jax: 0.10.0
libtpu: 0.0.40
codegen_flags: <defaults>
</compile_context>

<pallas_src>
import numpy as np
import jax
import jax.numpy as jnp
from jax import lax
from jax.experimental import pallas as pl
from jax.experimental.pallas import tpu as pltpu


def _make_kernel(num_layers, t_in, t_ar, batch, hidden, in_size):
    H = hidden
    B = batch

    def kernel(*refs):
        x2d_ref = refs[0]                        # (T_in*B, In)
        len_in_ref = refs[1]                     # (B, 1) int32
        mask_ref = refs[2]                       # (T_ar, B, 1) int32
        len_ar_ref = refs[3]                     # (B, 1) int32
        w_refs = refs[4:4 + 2 * num_layers]      # per layer: [W_ih^T; W_hh^T], bias
        teafo_ref = refs[4 + 2 * num_layers]     # (T_in, B, H)
        aureg_ref = refs[5 + 2 * num_layers]     # (T_ar, B, H)
        xproj_sc = refs[6 + 2 * num_layers]      # (T_in*B, 4H) scratch

        # ---- hoisted loop-invariant loads (weights, biases, lengths) ----
        w_full = [w_refs[2 * l][...] for l in range(num_layers)]            # (in_l+H, 4H)
        bias_b = [jnp.broadcast_to(w_refs[2 * l + 1][...], (B, 4 * H))
                  for l in range(num_layers)]                               # (B, 4H)
        w_ih0 = w_full[0][:in_size, :]           # (In, 4H)
        w_hh0 = w_full[0][in_size:, :]           # (H, 4H)
        len_in_v = len_in_ref[...]               # (B, 1)
        len_ar_v = len_ar_ref[...]               # (B, 1)

        # ---- layer-0 input projection for the whole TF phase: one big matmul ----
        xproj_sc[...] = (jnp.dot(x2d_ref[...], w_ih0,
                                 preferred_element_type=jnp.float32)
                         + w_refs[1][...])       # bias0 (1, 4H) broadcast

        def gates_to_hc(gates, c_prev):
            # gate order is [i, f, o, g]; sigmoid(x) = 0.5*tanh(0.5*x) + 0.5
            sig = 0.5 * jnp.tanh(0.5 * gates[:, :3 * H]) + 0.5
            g_g = jnp.tanh(gates[:, 3 * H:])
            i_g = sig[:, :H]
            f_g = sig[:, H:2 * H]
            o_g = sig[:, 2 * H:]
            c_new = f_g * c_prev + i_g * g_g
            h_new = o_g * jnp.tanh(c_new)
            return h_new, c_new

        def cell_fused(x_in, h_prev, c_prev, layer):
            zin = jnp.concatenate([x_in, h_prev], axis=-1)       # (B, in_l + H)
            gates = (jnp.dot(zin, w_full[layer],
                             preferred_element_type=jnp.float32)
                     + bias_b[layer])
            return gates_to_hc(gates, c_prev)

        zeros = jnp.zeros((B, H), jnp.float32)
        hs0 = tuple(zeros for _ in range(num_layers))            # hi in PyTorch
        cs0 = tuple(zeros for _ in range(num_layers))            # ci in PyTorch

        # ---- teacher-forcing phase (packed / variable-length semantics) ----
        def tf_body(t, carry):
            hs, cs = carry
            active = len_in_v > t                                # (B, 1) bool
            row = pl.multiple_of(t * B, B)
            xp_t = xproj_sc[pl.ds(row, B), :]                    # (B, 4H)
            new_hs, new_cs = [], []
            layer_in = None
            for l in range(num_layers):
                if l == 0:
                    gates = xp_t + jnp.dot(hs[0], w_hh0,
                                           preferred_element_type=jnp.float32)
                    h_new, c_new = gates_to_hc(gates, cs[0])
                else:
                    h_new, c_new = cell_fused(layer_in, hs[l], cs[l], l)
                new_hs.append(jnp.where(active, h_new, hs[l]))
                new_cs.append(jnp.where(active, c_new, cs[l]))
                layer_in = h_new
            teafo_ref[t] = jnp.where(active, layer_in, 0.0)
            return (tuple(new_hs), tuple(new_cs))

        hs, cs = lax.fori_loop(0, t_in, tf_body, (hs0, cs0))

        # last valid output of each row == final top-layer hidden state (held by mask)
        fb0 = hs[num_layers - 1]

        # ---- autoregressive phase ----
        # TODO(synk): PyTorch breaks out of the loop if a whole mask column is
        # all-False; the kernel instead keeps iterating with fully-masked (no-op)
        # state updates, which matches for prefix-style masks.
        def ar_body(t, carry):
            hs_c, cs_c, lstm_in = carry
            active = mask_ref[t] > 0                             # (B, 1)
            keep = jnp.logical_and(active, len_ar_v > t)         # pad_sequence trim
            new_hs, new_cs = [], []
            layer_in = lstm_in
            for l in range(num_layers):
                h_new, c_new = cell_fused(layer_in, hs_c[l], cs_c[l], l)
                new_hs.append(jnp.where(active, h_new, hs_c[l]))
                new_cs.append(jnp.where(active, c_new, cs_c[l]))
                layer_in = h_new
            aureg_ref[t] = jnp.where(keep, layer_in, 0.0)
            fb = jnp.where(active, layer_in, 0.0)                # feedback input
            return (tuple(new_hs), tuple(new_cs), fb)

        lax.fori_loop(0, t_ar, ar_body, (hs, cs, fb0))

    return kernel


def vlslstm_forward(x, lengths_in, lengths_aureg, mask_aureg, params,
                    num_layers, hidden_size):
    """x: (B, T, In) batch-first like PyTorch; lengths are host-side ints
    (mirrors pack_padded_sequence which requires CPU lengths)."""
    lengths_in = np.asarray(lengths_in, np.int64)
    lengths_aureg = np.asarray(lengths_aureg, np.int64)
    batch, _, in_size = x.shape
    H = hidden_size
    # The module feeds hidden-size outputs back into the LSTM during the
    # autoregressive loop, so input_size must equal hidden_size.
    assert in_size == H, "VLSLSTM requires input_size == hidden_size"

    t_in = int(lengths_in.max())        # pad_packed_sequence pads to real max len
    t_ar = int(lengths_aureg.max())
    b_pad = ((batch + 7) // 8) * 8      # full-sublane tiles + aligned slices

    # time-major, batch-padded inputs
    x_tm = jnp.transpose(jnp.asarray(x, jnp.float32)[:, :t_in, :], (1, 0, 2))
    x_tm = jnp.pad(x_tm, ((0, 0), (0, b_pad - batch), (0, 0)))
    x2d = x_tm.reshape(t_in * b_pad, in_size)

    mask_np = np.asarray(mask_aureg)[:, :t_ar].astype(np.int32)       # (B, T_ar)
    mask_np = np.pad(mask_np, ((0, b_pad - batch), (0, 0)))
    mask_tm = jnp.asarray(mask_np.T[:, :, None])                      # (T_ar, Bp, 1)

    len_in = jnp.asarray(np.pad(lengths_in.astype(np.int32),
                                (0, b_pad - batch)))[:, None]
    len_ar = jnp.asarray(np.pad(lengths_aureg.astype(np.int32),
                                (0, b_pad - batch)))[:, None]

    # gate reorder: PyTorch [i, f, g, o] -> [i, f, o, g] (sigmoid gates contiguous)
    reorder = np.concatenate([np.arange(0, H), np.arange(H, 2 * H),
                              np.arange(3 * H, 4 * H), np.arange(2 * H, 3 * H)])
    flat_w = []
    for (w_ih, w_hh, b_ih, b_hh) in params:
        w_ih_r = np.asarray(w_ih, np.float32)[reorder]                # (4H, in_l)
        w_hh_r = np.asarray(w_hh, np.float32)[reorder]                # (4H, H)
        b_r = (np.asarray(b_ih, np.float32) + np.asarray(b_hh, np.float32))[reorder]
        flat_w.append(jnp.asarray(np.concatenate([w_ih_r.T, w_hh_r.T], axis=0)))  # (in_l+H, 4H)
        flat_w.append(jnp.asarray(b_r[None, :]))                                  # (1, 4H)

    kernel = _make_kernel(num_layers, t_in, t_ar, b_pad, H, in_size)
    n_in = 4 + 2 * num_layers
    vmem = pl.BlockSpec(memory_space=pltpu.MemorySpace.VMEM)

    teafo_tm, aureg_tm = pl.pallas_call(
        kernel,
        out_shape=(jax.ShapeDtypeStruct((t_in, b_pad, H), jnp.float32),
                   jax.ShapeDtypeStruct((t_ar, b_pad, H), jnp.float32)),
        in_specs=[vmem] * n_in,
        out_specs=(vmem, vmem),
        scratch_shapes=[pltpu.VMEM((t_in * b_pad, 4 * H), jnp.float32)],
    )(x2d, len_in, mask_tm, len_ar, *flat_w)

    return (jnp.transpose(teafo_tm, (1, 0, 2))[:batch],   # outputs_teafo_pad (B, T_in, H)
            jnp.transpose(aureg_tm, (1, 0, 2))[:batch])   # outputs_aureg_pad (B, T_ar, H)


def _ref_forward(x, lengths_in, lengths_aureg, mask, params, num_layers, hidden):
    """Pure-numpy reference mirroring the PyTorch module's semantics."""
    def sig(v):
        return 1.0 / (1.0 + np.exp(-v))

    def cell(xv, hv, cv, p):
        w_ih, w_hh, b_ih, b_hh = p
        g = xv @ w_ih.T + hv @ w_hh.T + b_ih + b_hh
        i, f, gg, o = np.split(g, 4, axis=-1)
        i, f, gg, o = sig(i), sig(f), np.tanh(gg), sig(o)
        cn = f * cv + i * gg
        hn = o * np.tanh(cn)
        return hn, cn

    batch = x.shape[0]
    t_in = int(lengths_in.max())
    t_ar = int(lengths_aureg.max())
    h = np.zeros((num_layers, batch, hidden), np.float32)
    c = np.zeros_like(h)
    teafo = np.zeros((batch, t_in, hidden), np.float32)
    for t in range(t_in):
        act = (lengths_in > t)[:, None]
        inp = x[:, t]
        for l in range(num_layers):
            hn, cn = cell(inp, h[l], c[l], params[l])
            h[l] = np.where(act, hn, h[l])
            c[l] = np.where(act, cn, c[l])
            inp = hn
        teafo[:, t] = np.where(act, inp, 0.0)

    aureg = np.zeros((batch, t_ar, hidden), np.float32)
    lstm_in = h[-1].copy()
    for t in range(t_ar):
        act = (mask[:, t] > 0)[:, None]
        inp = lstm_in
        for l in range(num_layers):
            hn, cn = cell(inp, h[l], c[l], params[l])
            h[l] = np.where(act, hn, h[l])
            c[l] = np.where(act, cn, c[l])
            inp = hn
        out = np.where(act, inp, 0.0)
        aureg[:, t] = np.where(act & ((lengths_aureg > t)[:, None]), inp, 0.0)
        lstm_in = out
    return teafo, aureg


if __name__ == "__main__":
    batch, hidden, num_layers = 4, 32, 2
    input_size = hidden   # module feeds hidden-size outputs back into the LSTM
    t_in_max, t_ar_max = 8, 6
    lengths_in = np.array([8, 5, 8, 3], np.int64)
    lengths_aureg = np.array([6, 4, 6, 2], np.int64)
    mask_aureg = (np.arange(t_ar_max)[None, :] < lengths_aureg[:, None])

    key = jax.random.PRNGKey(0)
    keys = jax.random.split(key, 1 + 4 * num_layers)
    x = jax.random.normal(keys[0], (batch, t_in_max, input_size), jnp.float32)

    # Deterministic PyTorch-style LSTM init: U(-1/sqrt(H), 1/sqrt(H)); gate order i,f,g,o.
    k = 1.0 / np.sqrt(hidden)
    params = []
    for l in range(num_layers):
        in_l = input_size if l == 0 else hidden
        kk = keys[1 + 4 * l: 1 + 4 * (l + 1)]
        w_ih = np.asarray(jax.random.uniform(kk[0], (4 * hidden, in_l), jnp.float32, -k, k))
        w_hh = np.asarray(jax.random.uniform(kk[1], (4 * hidden, hidden), jnp.float32, -k, k))
        b_ih = np.asarray(jax.random.uniform(kk[2], (4 * hidden,), jnp.float32, -k, k))
        b_hh = np.asarray(jax.random.uniform(kk[3], (4 * hidden,), jnp.float32, -k, k))
        params.append((w_ih, w_hh, b_ih, b_hh))

    teafo, aureg = vlslstm_forward(x, lengths_in, lengths_aureg, mask_aureg,
                                   params, num_layers, hidden)
    teafo = jax.block_until_ready(teafo)
    aureg = jax.block_until_ready(aureg)

    ref_teafo, ref_aureg = _ref_forward(np.asarray(x), lengths_in, lengths_aureg,
                                        mask_aureg.astype(np.int32), params,
                                        num_layers, hidden)
    assert teafo.shape == (batch, int(lengths_in.max()), hidden)
    assert aureg.shape == (batch, int(lengths_aureg.max()), hidden)
    np.testing.assert_allclose(np.asarray(teafo), ref_teafo, atol=5e-5, rtol=5e-5)
    np.testing.assert_allclose(np.asarray(aureg), ref_aureg, atol=5e-5, rtol=5e-5)
    print("KERNEL_OK")
</pallas_src>

<mosaic_0001>
module attributes {stable_mosaic.version = 11 : i64} {
  func.func @kernel(%arg0: memref<64x32xf32, #tpu.memory_space<vmem>>, %arg1: memref<8x1xi32, #tpu.memory_space<vmem>>, %arg2: memref<6x8x1xi32, #tpu.memory_space<vmem>>, %arg3: memref<8x1xi32, #tpu.memory_space<vmem>>, %arg4: memref<64x128xf32, #tpu.memory_space<vmem>>, %arg5: memref<1x128xf32, #tpu.memory_space<vmem>>, %arg6: memref<64x128xf32, #tpu.memory_space<vmem>>, %arg7: memref<1x128xf32, #tpu.memory_space<vmem>>, %arg8: memref<8x8x32xf32, #tpu.memory_space<vmem>>, %arg9: memref<6x8x32xf32, #tpu.memory_space<vmem>>, %arg10: memref<64x128xf32, #tpu.memory_space<vmem>>) attributes {dimension_semantics = [], scalar_prefetch = 0 : i64, scratch_operands = 1 : i64, tpu.core_type = #tpu.core_type<tc>} {
    %c0 = arith.constant 0 : index
    %c0_0 = arith.constant 0 : index
    %0 = vector.load %arg4[%c0, %c0_0] : memref<64x128xf32, #tpu.memory_space<vmem>>, vector<64x128xf32>
    %c0_1 = arith.constant 0 : index
    %c0_2 = arith.constant 0 : index
    %1 = vector.load %arg6[%c0_1, %c0_2] : memref<64x128xf32, #tpu.memory_space<vmem>>, vector<64x128xf32>
    %c0_3 = arith.constant 0 : index
    %c0_4 = arith.constant 0 : index
    %2 = vector.load %arg5[%c0_3, %c0_4] : memref<1x128xf32, #tpu.memory_space<vmem>>, vector<1x128xf32>
    %3 = vector.shape_cast %2 : vector<1x128xf32> to vector<1x128xf32>
    %4 = vector.broadcast %3 : vector<1x128xf32> to vector<8x128xf32>
    %c0_5 = arith.constant 0 : index
    %c0_6 = arith.constant 0 : index
    %5 = vector.load %arg7[%c0_5, %c0_6] : memref<1x128xf32, #tpu.memory_space<vmem>>, vector<1x128xf32>
    %6 = vector.shape_cast %5 : vector<1x128xf32> to vector<1x128xf32>
    %7 = vector.broadcast %6 : vector<1x128xf32> to vector<8x128xf32>
    %8 = vector.extract_strided_slice %0 {offsets = [0, 0], sizes = [32, 128], strides = [1, 1]} : vector<64x128xf32> to vector<32x128xf32>
    %9 = vector.extract_strided_slice %0 {offsets = [32, 0], sizes = [32, 128], strides = [1, 1]} : vector<64x128xf32> to vector<32x128xf32>
    %c0_7 = arith.constant 0 : index
    %c0_8 = arith.constant 0 : index
    %10 = vector.load %arg1[%c0_7, %c0_8] : memref<8x1xi32, #tpu.memory_space<vmem>>, vector<8x1xi32>
    %c0_9 = arith.constant 0 : index
    %c0_10 = arith.constant 0 : index
    %11 = vector.load %arg3[%c0_9, %c0_10] : memref<8x1xi32, #tpu.memory_space<vmem>>, vector<8x1xi32>
    %c0_11 = arith.constant 0 : index
    %c0_12 = arith.constant 0 : index
    %12 = vector.load %arg0[%c0_11, %c0_12] : memref<64x32xf32, #tpu.memory_space<vmem>>, vector<64x32xf32>
    %cst = arith.constant dense<0.000000e+00> : vector<64x128xf32>
    %13 = tpu.matmul %12, %8, %cst {dimension_numbers = #tpu.dot_dimension_numbers<[1], [0], [0], [1], [0, 0, 1, 1], [], []>} : vector<64x32xf32>, vector<32x128xf32>, vector<64x128xf32> -> vector<64x128xf32>
    %c0_13 = arith.constant 0 : index
    %c0_14 = arith.constant 0 : index
    %14 = vector.load %arg5[%c0_13, %c0_14] : memref<1x128xf32, #tpu.memory_space<vmem>>, vector<1x128xf32>
    %15 = vector.broadcast %14 : vector<1x128xf32> to vector<64x128xf32>
    %16 = arith.addf %13, %15 : vector<64x128xf32>
    %c0_15 = arith.constant 0 : index
    %c0_16 = arith.constant 0 : index
    %17 = vector.load %arg10[%c0_15, %c0_16] : memref<64x128xf32, #tpu.memory_space<vmem>>, vector<64x128xf32>
    tpu.vector_store %arg10[%c0_15, %c0_16], %16 {strides = array<i32>} : memref<64x128xf32, #tpu.memory_space<vmem>>, vector<64x128xf32>,
    %cst_17 = arith.constant 0.000000e+00 : f32
    %18 = vector.broadcast %cst_17 : f32 to vector<8x32xf32>
    %c0_i32 = arith.constant 0 : i32
    %c8_i32 = arith.constant 8 : i32
    %19 = arith.addi %c0_i32, %c8_i32 : i32
    %c1_i32 = arith.constant 1 : i32
    %20:4 = scf.for %arg11 = %c0_i32 to %19 step %c1_i32 iter_args(%arg12 = %18, %arg13 = %18, %arg14 = %18, %arg15 = %18) -> (vector<8x32xf32>, vector<8x32xf32>, vector<8x32xf32>, vector<8x32xf32>)  : i32 {
      %23 = vector.broadcast %arg11 : i32 to vector<8x1xi32>
      %24 = arith.cmpi sgt, %10, %23 : vector<8x1xi32>
      %c8_i32_22 = arith.constant 8 : i32
      %25 = arith.muli %arg11, %c8_i32_22 : i32
      %26 = tpu.assume_multiple %25, 8 : i32
      %27 = arith.index_cast %26 : i32 to index
      %c0_23 = arith.constant 0 : index
      %28 = vector.load %arg10[%27, %c0_23] : memref<64x128xf32, #tpu.memory_space<vmem>>, vector<8x128xf32>
      %cst_24 = arith.constant dense<0.000000e+00> : vector<8x128xf32>
      %29 = tpu.matmul %arg12, %9, %cst_24 {dimension_numbers = #tpu.dot_dimension_numbers<[1], [0], [0], [1], [0, 0, 1, 1], [], []>} : vector<8x32xf32>, vector<32x128xf32>, vector<8x128xf32> -> vector<8x128xf32>
      %30 = arith.addf %28, %29 : vector<8x128xf32>
      %31 = vector.extract_strided_slice %30 {offsets = [0, 0], sizes = [8, 96], strides = [1, 1]} : vector<8x128xf32> to vector<8x96xf32>
      %cst_25 = arith.constant 5.000000e-01 : f32
      %32 = vector.broadcast %cst_25 : f32 to vector<8x96xf32>
      %33 = arith.mulf %32, %31 : vector<8x96xf32>
      %34 = math.tanh %33 : vector<8x96xf32>
      %cst_26 = arith.constant 5.000000e-01 : f32
      %35 = vector.broadcast %cst_26 : f32 to vector<8x96xf32>
      %36 = arith.mulf %35, %34 : vector<8x96xf32>
      %cst_27 = arith.constant 5.000000e-01 : f32
      %37 = vector.broadcast %cst_27 : f32 to vector<8x96xf32>
      %38 = arith.addf %36, %37 : vector<8x96xf32>
      %39 = vector.extract_strided_slice %30 {offsets = [0, 96], sizes = [8, 32], strides = [1, 1]} : vector<8x128xf32> to vector<8x32xf32>
      %40 = math.tanh %39 : vector<8x32xf32>
      %41 = vector.extract_strided_slice %38 {offsets = [0, 0], sizes = [8, 32], strides = [1, 1]} : vector<8x96xf32> to vector<8x32xf32>
      %42 = vector.extract_strided_slice %38 {offsets = [0, 32], sizes = [8, 32], strides = [1, 1]} : vector<8x96xf32> to vector<8x32xf32>
      %43 = vector.extract_strided_slice %38 {offsets = [0, 64], sizes = [8, 32], strides = [1, 1]} : vector<8x96xf32> to vector<8x32xf32>
      %44 = arith.mulf %42, %arg14 : vector<8x32xf32>
      %45 = arith.mulf %41, %40 : vector<8x32xf32>
      %46 = arith.addf %44, %45 : vector<8x32xf32>
      %47 = math.tanh %46 : vector<8x32xf32>
      %48 = arith.mulf %43, %47 : vector<8x32xf32>
      %49 = vector.shape_cast %24 : vector<8x1xi1> to vector<8x1xi1>
      %50 = vector.broadcast %49 : vector<8x1xi1> to vector<8x32xi1>
      %51 = arith.select %50, %48, %arg12 : vector<8x32xi1>, vector<8x32xf32>
      %52 = vector.shape_cast %24 : vector<8x1xi1> to vector<8x1xi1>
      %53 = vector.broadcast %52 : vector<8x1xi1> to vector<8x32xi1>
      %54 = arith.select %53, %46, %arg14 : vector<8x32xi1>, vector<8x32xf32>
      %55 = tpu.concatenate %48, %arg13 in 1 : vector<8x32xf32>, vector<8x32xf32> -> vector<8x64xf32>
      %cst_28 = arith.constant dense<0.000000e+00> : vector<8x128xf32>
      %56 = tpu.matmul %55, %1, %cst_28 {dimension_numbers = #tpu.dot_dimension_numbers<[1], [0], [0], [1], [0, 0, 1, 1], [], []>} : vector<8x64xf32>, vector<64x128xf32>, vector<8x128xf32> -> vector<8x128xf32>
      %57 = arith.addf %56, %7 : vector<8x128xf32>
      %58 = vector.extract_strided_slice %57 {offsets = [0, 0], sizes = [8, 96], strides = [1, 1]} : vector<8x128xf32> to vector<8x96xf32>
      %cst_29 = arith.constant 5.000000e-01 : f32
      %59 = vector.broadcast %cst_29 : f32 to vector<8x96xf32>
      %60 = arith.mulf %59, %58 : vector<8x96xf32>
      %61 = math.tanh %60 : vector<8x96xf32>
      %cst_30 = arith.constant 5.000000e-01 : f32
      %62 = vector.broadcast %cst_30 : f32 to vector<8x96xf32>
      %63 = arith.mulf %62, %61 : vector<8x96xf32>
      %cst_31 = arith.constant 5.000000e-01 : f32
      %64 = vector.broadcast %cst_31 : f32 to vector<8x96xf32>
      %65 = arith.addf %63, %64 : vector<8x96xf32>
      %66 = vector.extract_strided_slice %57 {offsets = [0, 96], sizes = [8, 32], strides = [1, 1]} : vector<8x128xf32> to vector<8x32xf32>
      %67 = math.tanh %66 : vector<8x32xf32>
      %68 = vector.extract_strided_slice %65 {offsets = [0, 0], sizes = [8, 32], strides = [1, 1]} : vector<8x96xf32> to vector<8x32xf32>
      %69 = vector.extract_strided_slice %65 {offsets = [0, 32], sizes = [8, 32], strides = [1, 1]} : vector<8x96xf32> to vector<8x32xf32>
      %70 = vector.extract_strided_slice %65 {offsets = [0, 64], sizes = [8, 32], strides = [1, 1]} : vector<8x96xf32> to vector<8x32xf32>
      %71 = arith.mulf %69, %arg15 : vector<8x32xf32>
      %72 = arith.mulf %68, %67 : vector<8x32xf32>
      %73 = arith.addf %71, %72 : vector<8x32xf32>
      %74 = math.tanh %73 : vector<8x32xf32>
      %75 = arith.mulf %70, %74 : vector<8x32xf32>
      %76 = vector.shape_cast %24 : vector<8x1xi1> to vector<8x1xi1>
      %77 = vector.broadcast %76 : vector<8x1xi1> to vector<8x32xi1>
      %78 = arith.select %77, %75, %arg13 : vector<8x32xi1>, vector<8x32xf32>
      %79 = vector.shape_cast %24 : vector<8x1xi1> to vector<8x1xi1>
      %80 = vector.broadcast %79 : vector<8x1xi1> to vector<8x32xi1>
      %81 = arith.select %80, %73, %arg15 : vector<8x32xi1>, vector<8x32xf32>
      %cst_32 = arith.constant 0.000000e+00 : f32
      %82 = vector.shape_cast %24 : vector<8x1xi1> to vector<8x1xi1>
      %83 = vector.broadcast %82 : vector<8x1xi1> to vector<8x32xi1>
      %84 = vector.broadcast %cst_32 : f32 to vector<8x32xf32>
      %85 = arith.select %83, %75, %84 : vector<8x32xi1>, vector<8x32xf32>
      %86 = arith.index_cast %arg11 : i32 to index
      %c0_33 = arith.constant 0 : index
      %c0_34 = arith.constant 0 : index
      %87 = vector.load %arg8[%86, %c0_33, %c0_34] : memref<8x8x32xf32, #tpu.memory_space<vmem>>, vector<1x8x32xf32>
      %88 = vector.shape_cast %87 : vector<1x8x32xf32> to vector<8x32xf32>
      %89 = vector.shape_cast %85 : vector<8x32xf32> to vector<1x8x32xf32>
      tpu.vector_store %arg8[%86, %c0_33, %c0_34], %89 {strides = array<i32>} : memref<8x8x32xf32, #tpu.memory_space<vmem>>, vector<1x8x32xf32>,
      scf.yield %51, %78, %54, %81 : vector<8x32xf32>, vector<8x32xf32>, vector<8x32xf32>, vector<8x32xf32>
    }
    %c8_i32_18 = arith.constant 8 : i32
    %c0_i32_19 = arith.constant 0 : i32
    %c6_i32 = arith.constant 6 : i32
    %21 = arith.addi %c0_i32_19, %c6_i32 : i32
    %c1_i32_20 = arith.constant 1 : i32
    %22:5 = scf.for %arg11 = %c0_i32_19 to %21 step %c1_i32_20 iter_args(%arg12 = %20#0, %arg13 = %20#1, %arg14 = %20#2, %arg15 = %20#3, %arg16 = %20#1) -> (vector<8x32xf32>, vector<8x32xf32>, vector<8x32xf32>, vector<8x32xf32>, vector<8x32xf32>)  : i32 {
      %23 = arith.index_cast %arg11 : i32 to index
      %c0_22 = arith.constant 0 : index
      %c0_23 = arith.constant 0 : index
      %24 = vector.load %arg2[%23, %c0_22, %c0_23] : memref<6x8x1xi32, #tpu.memory_space<vmem>>, vector<1x8x1xi32>
      %25 = vector.shape_cast %24 : vector<1x8x1xi32> to vector<8x1xi32>
      %c0_i32_24 = arith.constant 0 : i32
      %26 = vector.broadcast %c0_i32_24 : i32 to vector<8x1xi32>
      %27 = arith.cmpi sgt, %25, %26 : vector<8x1xi32>
      %28 = vector.broadcast %arg11 : i32 to vector<8x1xi32>
      %29 = arith.cmpi sgt, %11, %28 : vector<8x1xi32>
      %30 = arith.andi %27, %29 : vector<8x1xi1>
      %31 = tpu.concatenate %arg16, %arg12 in 1 : vector<8x32xf32>, vector<8x32xf32> -> vector<8x64xf32>
      %cst_25 = arith.constant dense<0.000000e+00> : vector<8x128xf32>
      %32 = tpu.matmul %31, %0, %cst_25 {dimension_numbers = #tpu.dot_dimension_numbers<[1], [0], [0], [1], [0, 0, 1, 1], [], []>} : vector<8x64xf32>, vector<64x128xf32>, vector<8x128xf32> -> vector<8x128xf32>
      %33 = arith.addf %32, %4 : vector<8x128xf32>
      %34 = vector.extract_strided_slice %33 {offsets = [0, 0], sizes = [8, 96], strides = [1, 1]} : vector<8x128xf32> to vector<8x96xf32>
      %cst_26 = arith.constant 5.000000e-01 : f32
      %35 = vector.broadcast %cst_26 : f32 to vector<8x96xf32>
      %36 = arith.mulf %35, %34 : vector<8x96xf32>
      %37 = math.tanh %36 : vector<8x96xf32>
      %cst_27 = arith.constant 5.000000e-01 : f32
      %38 = vector.broadcast %cst_27 : f32 to vector<8x96xf32>
      %39 = arith.mulf %38, %37 : vector<8x96xf32>
      %cst_28 = arith.constant 5.000000e-01 : f32
      %40 = vector.broadcast %cst_28 : f32 to vector<8x96xf32>
      %41 = arith.addf %39, %40 : vector<8x96xf32>
      %42 = vector.extract_strided_slice %33 {offsets = [0, 96], sizes = [8, 32], strides = [1, 1]} : vector<8x128xf32> to vector<8x32xf32>
      %43 = math.tanh %42 : vector<8x32xf32>
      %44 = vector.extract_strided_slice %41 {offsets = [0, 0], sizes = [8, 32], strides = [1, 1]} : vector<8x96xf32> to vector<8x32xf32>
      %45 = vector.extract_strided_slice %41 {offsets = [0, 32], sizes = [8, 32], strides = [1, 1]} : vector<8x96xf32> to vector<8x32xf32>
      %46 = vector.extract_strided_slice %41 {offsets = [0, 64], sizes = [8, 32], strides = [1, 1]} : vector<8x96xf32> to vector<8x32xf32>
      %47 = arith.mulf %45, %arg14 : vector<8x32xf32>
      %48 = arith.mulf %44, %43 : vector<8x32xf32>
      %49 = arith.addf %47, %48 : vector<8x32xf32>
      %50 = math.tanh %49 : vector<8x32xf32>
      %51 = arith.mulf %46, %50 : vector<8x32xf32>
      %52 = vector.shape_cast %27 : vector<8x1xi1> to vector<8x1xi1>
      %53 = vector.broadcast %52 : vector<8x1xi1> to vector<8x32xi1>
      %54 = arith.select %53, %51, %arg12 : vector<8x32xi1>, vector<8x32xf32>
      %55 = vector.shape_cast %27 : vector<8x1xi1> to vector<8x1xi1>
      %56 = vector.broadcast %55 : vector<8x1xi1> to vector<8x32xi1>
      %57 = arith.select %56, %49, %arg14 : vector<8x32xi1>, vector<8x32xf32>
      %58 = tpu.concatenate %51, %arg13 in 1 : vector<8x32xf32>, vector<8x32xf32> -> vector<8x64xf32>
      %cst_29 = arith.constant dense<0.000000e+00> : vector<8x128xf32>
      %59 = tpu.matmul %58, %1, %cst_29 {dimension_numbers = #tpu.dot_dimension_numbers<[1], [0], [0], [1], [0, 0, 1, 1], [], []>} : vector<8x64xf32>, vector<64x128xf32>, vector<8x128xf32> -> vector<8x128xf32>
      %60 = arith.addf %59, %7 : vector<8x128xf32>
      %61 = vector.extract_strided_slice %60 {offsets = [0, 0], sizes = [8, 96], strides = [1, 1]} : vector<8x128xf32> to vector<8x96xf32>
      %cst_30 = arith.constant 5.000000e-01 : f32
      %62 = vector.broadcast %cst_30 : f32 to vector<8x96xf32>
      %63 = arith.mulf %62, %61 : vector<8x96xf32>
      %64 = math.tanh %63 : vector<8x96xf32>
      %cst_31 = arith.constant 5.000000e-01 : f32
      %65 = vector.broadcast %cst_31 : f32 to vector<8x96xf32>
      %66 = arith.mulf %65, %64 : vector<8x96xf32>
      %cst_32 = arith.constant 5.000000e-01 : f32
      %67 = vector.broadcast %cst_32 : f32 to vector<8x96xf32>
      %68 = arith.addf %66, %67 : vector<8x96xf32>
      %69 = vector.extract_strided_slice %60 {offsets = [0, 96], sizes = [8, 32], strides = [1, 1]} : vector<8x128xf32> to vector<8x32xf32>
      %70 = math.tanh %69 : vector<8x32xf32>
      %71 = vector.extract_strided_slice %68 {offsets = [0, 0], sizes = [8, 32], strides = [1, 1]} : vector<8x96xf32> to vector<8x32xf32>
      %72 = vector.extract_strided_slice %68 {offsets = [0, 32], sizes = [8, 32], strides = [1, 1]} : vector<8x96xf32> to vector<8x32xf32>
      %73 = vector.extract_strided_slice %68 {offsets = [0, 64], sizes = [8, 32], strides = [1, 1]} : vector<8x96xf32> to vector<8x32xf32>
      %74 = arith.mulf %72, %arg15 : vector<8x32xf32>
      %75 = arith.mulf %71, %70 : vector<8x32xf32>
      %76 = arith.addf %74, %75 : vector<8x32xf32>
      %77 = math.tanh %76 : vector<8x32xf32>
      %78 = arith.mulf %73, %77 : vector<8x32xf32>
      %79 = vector.shape_cast %27 : vector<8x1xi1> to vector<8x1xi1>
      %80 = vector.broadcast %79 : vector<8x1xi1> to vector<8x32xi1>
      %81 = arith.select %80, %78, %arg13 : vector<8x32xi1>, vector<8x32xf32>
      %82 = vector.shape_cast %27 : vector<8x1xi1> to vector<8x1xi1>
      %83 = vector.broadcast %82 : vector<8x1xi1> to vector<8x32xi1>
      %84 = arith.select %83, %76, %arg15 : vector<8x32xi1>, vector<8x32xf32>
      %cst_33 = arith.constant 0.000000e+00 : f32
      %85 = vector.shape_cast %30 : vector<8x1xi1> to vector<8x1xi1>
      %86 = vector.broadcast %85 : vector<8x1xi1> to vector<8x32xi1>
      %87 = vector.broadcast %cst_33 : f32 to vector<8x32xf32>
      %88 = arith.select %86, %78, %87 : vector<8x32xi1>, vector<8x32xf32>
      %89 = arith.index_cast %arg11 : i32 to index
      %c0_34 = arith.constant 0 : index
      %c0_35 = arith.constant 0 : index
      %90 = vector.load %arg9[%89, %c0_34, %c0_35] : memref<6x8x32xf32, #tpu.memory_space<vmem>>, vector<1x8x32xf32>
      %91 = vector.shape_cast %90 : vector<1x8x32xf32> to vector<8x32xf32>
      %92 = vector.shape_cast %88 : vector<8x32xf32> to vector<1x8x32xf32>
      tpu.vector_store %arg9[%89, %c0_34, %c0_35], %92 {strides = array<i32>} : memref<6x8x32xf32, #tpu.memory_space<vmem>>, vector<1x8x32xf32>,
      %cst_36 = arith.constant 0.000000e+00 : f32
      %93 = vector.shape_cast %27 : vector<8x1xi1> to vector<8x1xi1>
      %94 = vector.broadcast %93 : vector<8x1xi1> to vector<8x32xi1>
      %95 = vector.broadcast %cst_36 : f32 to vector<8x32xf32>
      %96 = arith.select %94, %78, %95 : vector<8x32xi1>, vector<8x32xf32>
      scf.yield %54, %81, %57, %84, %96 : vector<8x32xf32>, vector<8x32xf32>, vector<8x32xf32>, vector<8x32xf32>, vector<8x32xf32>
    }
    %c6_i32_21 = arith.constant 6 : i32
    return
  }
}

</mosaic_0001>

<llo_original>
// kernel: tpu_custom_call.1
$region0: #{tpu_custom_call.1}
  #allocation0 [shape = 'u32[]', space=smem, size = 0x4, offset = 0x4, fixed_abs, tag = 'smem constant byte address 0x4 - core index']
  #allocation1 [shape = 'u32[144,128]{1,0:T(1,128)}', space=vmem, size = 0x12000, scoped, tag = 'internal scratch']
  #allocation2 [shape = 'f32[64,128]{1,0:T(8,128)}', space=vmem, size = 0x8000, scoped, tag = 'scratch operand']
  %s0 = inlined_call_operand.vmem [shape: f32[64,32], index: 0, kind: input, shape index: {}]
  %s1 = inlined_call_operand.vmem [shape: s32[8,1], index: 1, kind: input, shape index: {}]
  %s2 = inlined_call_operand.vmem [shape: s32[6,8,1], index: 2, kind: input, shape index: {}]
  %s3 = inlined_call_operand.vmem [shape: s32[8,1], index: 3, kind: input, shape index: {}]
  %s4 = inlined_call_operand.vmem [shape: f32[64,128], index: 4, kind: input, shape index: {}]
  %s5 = inlined_call_operand.vmem [shape: f32[1,128], index: 5, kind: input, shape index: {}]
  %s6 = inlined_call_operand.vmem [shape: f32[64,128], index: 6, kind: input, shape index: {}]
  %s7 = inlined_call_operand.vmem [shape: f32[1,128], index: 7, kind: input, shape index: {}]
  %s8 = inlined_call_operand.hbm [shape: f32[8,8,32], index: 8, kind: output, shape index: {0}]
  %s9 = inlined_call_operand.hbm [shape: f32[6,8,32], index: 9, kind: output, shape index: {1}]
  %10 = xla_tuple %s8, %s9
  %s11 = sld [smem:[#allocation0]]
  $region64: #{tpu_custom_call.1} parent=0
    _
  %s13 = ssub.s32 1, %s11
  %s14 = scalar_select 0, %s13, %s11
  $region1: #{tpu_custom_call.1} parent=0
    #allocation3 [shape = 'u8[32768]{0}', space=vmem, size = 0x8000, scoped, tag = 'output window, operand 0, single buffered']
    #allocation4 [shape = 's32[1]{0}', space=sflag, size = 0x4, scoped, tag = 'scoped memory for tpu_custom_call.1']
    #allocation5 [shape = 'u8[24576]{0}', space=vmem, size = 0x6000, scoped, tag = 'output window, operand 1, single buffered']
    #allocation6 [shape = 's32[1]{0}', space=sflag, size = 0x4, scoped, tag = 'scoped memory for tpu_custom_call.1']
    %15 = vsyncpa [#allocation4], 0
    %16 = vsyncpa [#allocation6], 0
    // Predicated region
    $region2: #{tpu_custom_call.1} parent=1 // pred_check
      _
    $region3: #{tpu_custom_call.1} parent=1 // pred_check_branch
      %18 = sbr.rel (0) target = $region5
    $region4: #{tpu_custom_call.1} parent=1 // pred_region
      _
    $region5: #{tpu_custom_call.1} parent=1 // pred_fallthru
      _
    // Predicated region
    $region6: #{tpu_custom_call.1} parent=1 // pred_check
      _
    $region7: #{tpu_custom_call.1} parent=1 // pred_check_branch
      %20 = sbr.rel (0) target = $region9
    $region8: #{tpu_custom_call.1} parent=1 // pred_region
      _
    $region9: #{tpu_custom_call.1} parent=1 // pred_fallthru
      _
    // Predicated region
    $region10: #{tpu_custom_call.1} parent=1 // pred_check
      _
    $region11: #{tpu_custom_call.1} parent=1 // pred_check_branch
      %22 = sbr.rel (0) target = $region13
    $region12: #{tpu_custom_call.1} parent=1 // pred_region
      _
    $region13: #{tpu_custom_call.1} parent=1 // pred_fallthru
      _
    // Predicated region
    $region14: #{tpu_custom_call.1} parent=1 // pred_check
      _
    $region15: #{tpu_custom_call.1} parent=1 // pred_check_branch
      %24 = sbr.rel (0) target = $region17
    $region16: #{tpu_custom_call.1} parent=1 // pred_region
      _
    $region17: #{tpu_custom_call.1} parent=1 // pred_fallthru
      _
    // Predicated region
    $region18: #{tpu_custom_call.1} parent=1 // pred_check
      _
    $region19: #{tpu_custom_call.1} parent=1 // pred_check_branch
      %26 = sbr.rel (0) target = $region21
    $region20: #{tpu_custom_call.1} parent=1 // pred_region
      _
    $region21: #{tpu_custom_call.1} parent=1 // pred_fallthru
      _
    // Predicated region
    $region22: #{tpu_custom_call.1} parent=1 // pred_check
      _
    $region23: #{tpu_custom_call.1} parent=1 // pred_check_branch
      %28 = sbr.rel (0) target = $region25
    $region24: #{tpu_custom_call.1} parent=1 // pred_region
      _
    $region25: #{tpu_custom_call.1} parent=1 // pred_fallthru
      _
    // Predicated region
    $region26: #{tpu_custom_call.1} parent=1 // pred_check
      _
    $region27: #{tpu_custom_call.1} parent=1 // pred_check_branch
      %30 = sbr.rel (0) target = $region29
    $region28: #{tpu_custom_call.1} parent=1 // pred_region
      _
    $region29: #{tpu_custom_call.1} parent=1 // pred_fallthru
      _
    // Predicated region
    $region30: #{tpu_custom_call.1} parent=1 // pred_check
      _
    $region31: #{tpu_custom_call.1} parent=1 // pred_check_branch
      %32 = sbr.rel (0) target = $region33
    $region32: #{tpu_custom_call.1} parent=1 // pred_region
      _
    $region33: #{tpu_custom_call.1} parent=1 // pred_fallthru
      _
    %v33 = vld [vmem:[%s4] sm:$0xff]
    %v34 = vld [vmem:[%s4 + $0x8] sm:$0xff]
    %v35 = vld [vmem:[%s4 + $0x10] sm:$0xff]
    %v36 = vld [vmem:[%s4 + $0x18] sm:$0xff]
    %v37 = vld [vmem:[%s4 + $0x20] sm:$0xff]
    %v38 = vld [vmem:[%s4 + $0x28] sm:$0xff]
    %v39 = vld [vmem:[%s4 + $0x30] sm:$0xff]
    %v40 = vld [vmem:[%s4 + $0x38] sm:$0xff]
    %v41 = vld [vmem:[%s6] sm:$0xff]
    %v42 = vld [vmem:[%s6 + $0x8] sm:$0xff]
    %v43 = vld [vmem:[%s6 + $0x10] sm:$0xff]
    %v44 = vld [vmem:[%s6 + $0x18] sm:$0xff]
    %v45 = vld [vmem:[%s6 + $0x20] sm:$0xff]
    %v46 = vld [vmem:[%s6 + $0x28] sm:$0xff]
    %v47 = vld [vmem:[%s6 + $0x30] sm:$0xff]
    %v48 = vld [vmem:[%s6 + $0x38] sm:$0xff]
    %v49 = vld [vmem:[%s5] sm:$0x1]
    %v51 = vlaneseq
    %v52 = vshrl.u32 %v51, 7
    %v53 = vsub.s32 0, %v52
    %v54 = vrot.slane %v49, %v53
    %v56 = vld [vmem:[%s7] sm:$0x1]
    %v58 = vlaneseq
    %v59 = vshrl.u32 %v58, 7
    %v60 = vsub.s32 0, %v59
    %v61 = vrot.slane %v56, %v60
    %v63 = vld [vmem:[%s1] sm:$0xff]
    %v64 = vld [vmem:[%s3] sm:$0xff]
    %v65 = vld [vmem:[%s0] sm:$0xff]
    %v66 = vld [vmem:[%s0 + $0x8] sm:$0xff]
    %v67 = vld [vmem:[%s0 + $0x10] sm:$0xff]
    %v68 = vld [vmem:[%s0 + $0x18] sm:$0xff]
    %v69 = vld [vmem:[%s0 + $0x20] sm:$0xff]
    %v70 = vld [vmem:[%s0 + $0x28] sm:$0xff]
    %v71 = vld [vmem:[%s0 + $0x30] sm:$0xff]
    %v72 = vld [vmem:[%s0 + $0x38] sm:$0xff]
    %vm73 = vcmask 261120
    %v75 = vsel %vm73, %v65, 0
    %v78 = vsel %vm73, %v66, 0
    %v81 = vsel %vm73, %v67, 0
    %v84 = vsel %vm73, %v68, 0
    %v87 = vsel %vm73, %v69, 0
    %v90 = vsel %vm73, %v70, 0
    %v93 = vsel %vm73, %v71, 0
    %v96 = vsel %vm73, %v72, 0
    %98 = vmatprep.subr.mxu0 0.0
    %99 = vmatpush1.msra.mxu0 %v33
    %100 = vmatprep.subr.mxu0 0.0
    %101 = vmatpush1.msra.mxu0 %v34
    %102 = vmatprep.subr.mxu0 0.0
    %103 = vmatpush1.msra.mxu0 %v35
    %104 = vmatprep.subr.mxu0 0.0
    %105 = vmatpush1.msra.mxu0 %v36
    %106 = vmatprep.subr.mxu0 0.0
    %107 = vmatpush1.msra.mxu0 0.0
    %108 = vmatprep.subr.mxu0 0.0
    %109 = vmatpush1.msra.mxu0 0.0
    %110 = vmatprep.subr.mxu0 0.0
    %111 = vmatpush1.msra.mxu0 0.0
    %112 = vmatprep.subr.mxu0 0.0
    %113 = vmatpush1.msra.mxu0 0.0
    %114 = vmatprep.subr.mxu0 0.0
    %115 = vmatpush1.msra.mxu0 0.0
    %116 = vmatprep.subr.mxu0 0.0
    %117 = vmatpush1.msra.mxu0 0.0
    %118 = vmatprep.subr.mxu0 0.0
    %119 = vmatpush1.msra.mxu0 0.0
    %120 = vmatprep.subr.mxu0 0.0
    %121 = vmatpush1.msra.mxu0 0.0
    %122 = vmatprep.subr.mxu0 0.0
    %123 = vmatpush1.msra.mxu0 0.0
    %124 = vmatprep.subr.mxu0 0.0
    %125 = vmatpush1.msra.mxu0 0.0
    %126 = vmatprep.subr.mxu0 0.0
    %127 = vmatpush1.msra.mxu0 0.0
    %128 = vmatprep.subr.mxu0 0.0
    %129 = vmatpush1.msra.mxu0 0.0
    %130 = vmatprep.subr.mxu0 0.0
    %131 = vmatpush1.msra.mxu0 0.0
    %132 = vmatprep.subr.mxu0 0.0
    %133 = vmatpush1.msra.mxu0 0.0
    %134 = vmatprep.subr.mxu0 0.0
    %135 = vmatpush1.msra.mxu0 0.0
    %136 = vmatprep.subr.mxu0 0.0
    %137 = vmatpush1.msra.mxu0 0.0
    %138 = vmatprep.subr.mxu0 0.0
    %139 = vmatpush1.msra.mxu0 0.0
    %140 = vmatprep.subr.mxu0 0.0
    %141 = vmatpush1.msra.mxu0 0.0
    %142 = vmatprep.subr.mxu0 0.0
    %143 = vmatpush1.msra.mxu0 0.0
    %144 = vmatprep.subr.mxu0 0.0
    %145 = vmatpush1.msra.mxu0 0.0
    %146 = vmatprep.subr.mxu0 0.0
    %147 = vmatpush1.msra.mxu0 0.0
    %148 = vmatprep.subr.mxu0 0.0
    %149 = vmatpush1.msra.mxu0 0.0
    %150 = vmatprep.subr.mxu0 0.0
    %151 = vmatpush1.msra.mxu0 0.0
    %152 = vmatprep.subr.mxu0 0.0
    %153 = vmatpush1.msra.mxu0 0.0
    %154 = vmatprep.subr.mxu0 0.0
    %155 = vmatpush1.msra.mxu0 0.0
    %156 = vmatprep.subr.mxu0 0.0
    %157 = vmatpush1.msra.mxu0 0.0
    %158 = vmatprep.subr.mxu0 0.0
    %159 = vmatpush1.msra.mxu0 0.0
    %160 = vmatprep.subr.mxu0 0.0
    %161 = vmatpush1.msra.mxu0 0.0
    %162 = vmatprep.mubr.f32.mxu0 0.0
    %163 = vmatmul.mubr.f32.gmra.mrb[0].mxu0 %v75
    %v164 = vpop.f32.mrb[0].mxu0
    %v165 = vadd.f32 %v54, %v164
    %v166 = vpop.f32.mrb[0].mxu0
    %167 = vmatprep.mubr.f32.mxu0 0.0
    %168 = vmatmul.mubr.f32.gmra.mrb[0].mxu0 %v78
    %v169 = vpop.f32.mrb[0].mxu0
    %v170 = vadd.f32 %v54, %v169
    %v171 = vpop.f32.mrb[0].mxu0
    %172 = vmatprep.mubr.f32.mxu0 0.0
    %173 = vmatmul.mubr.f32.gmra.mrb[0].mxu0 %v81
    %v174 = vpop.f32.mrb[0].mxu0
    %v175 = vadd.f32 %v54, %v174
    %v176 = vpop.f32.mrb[0].mxu0
    %177 = vmatprep.mubr.f32.mxu0 0.0
    %178 = vmatmul.mubr.f32.gmra.mrb[0].mxu0 %v84
    %v179 = vpop.f32.mrb[0].mxu0
    %v180 = vadd.f32 %v54, %v179
    %v181 = vpop.f32.mrb[0].mxu0
    %182 = vmatprep.mubr.f32.mxu0 0.0
    %183 = vmatmul.mubr.f32.gmra.mrb[0].mxu0 %v87
    %v184 = vpop.f32.mrb[0].mxu0
    %v185 = vadd.f32 %v54, %v184
    %v186 = vpop.f32.mrb[0].mxu0
    %187 = vmatprep.mubr.f32.mxu0 0.0
    %188 = vmatmul.mubr.f32.gmra.mrb[0].mxu0 %v90
    %v189 = vpop.f32.mrb[0].mxu0
    %v190 = vadd.f32 %v54, %v189
    %v191 = vpop.f32.mrb[0].mxu0
    %192 = vmatprep.mubr.f32.mxu0 0.0
    %193 = vmatmul.mubr.f32.gmra.mrb[0].mxu0 %v93
    %v194 = vpop.f32.mrb[0].mxu0
    %v195 = vadd.f32 %v54, %v194
    %v196 = vpop.f32.mrb[0].mxu0
    %197 = vmatprep.mubr.f32.mxu0 0.0
    %198 = vmatmul.mubr.f32.gmra.mrb[0].mxu0 %v96
    %v199 = vpop.f32.mrb[0].mxu0
    %v200 = vadd.f32 %v54, %v199
    %v201 = vpop.f32.mrb[0].mxu0
    %202 = vdwg.mxu0
    %203 = vst [vmem:[#allocation2] sm:$0xff] %v165
    %204 = vst [vmem:[#allocation2 + $0x8] sm:$0xff] %v170
    %205 = vst [vmem:[#allocation2 + $0x10] sm:$0xff] %v175
    %206 = vst [vmem:[#allocation2 + $0x18] sm:$0xff] %v180
    %207 = vst [vmem:[#allocation2 + $0x20] sm:$0xff] %v185
    %208 = vst [vmem:[#allocation2 + $0x28] sm:$0xff] %v190
    %209 = vst [vmem:[#allocation2 + $0x30] sm:$0xff] %v195
    %210 = vst [vmem:[#allocation2 + $0x38] sm:$0xff] %v200
    loop: start=0, step=1, limit=8
    $region34: #{tpu_custom_call.1} parent=1 // loop_pre_header
      _
    $region35: #{tpu_custom_call.1} parent=1 // loop_header
      %s212 = sphi 0, %s216
      %p213 = scmp.ge.s32.totalorder %s212, 8
      %v217 = vphi 0.0, %v329
      %v218 = vphi 0.0, %v436
      %v219 = vphi 0.0, %v330
      %v220 = vphi 0.0, %v437
    $region36: #{tpu_custom_call.1} parent=1 // loop_header_branch
      %215 = sbr.rel (%p213) target = $region40
    $region37: #{tpu_custom_call.1} parent=1 // loop_body
      %v221 = vstv %s212
      %vm222 = vcmp.gt.s32.totalorder %v63, %v221
      %s223 = smul.u32 %s212, 8
      %s224 = scalar_lea.vmem [#allocation2], %s223
      %v225 = vld [vmem:[%s224] sm:$0xff]
      %227 = vrot.lane.b32.xlu0 %v217, 64
      %v228 = vpop.permute.xlu0 %227
      %v229 = vsel %vm73, %v228, 0
      %231 = vmatprep.subr.mxu0 0.0
      %232 = vmatpush1.msra.mxu0 %v37
      %233 = vmatprep.subr.mxu0 0.0
      %234 = vmatpush1.msra.mxu0 %v38
      %235 = vmatprep.subr.mxu0 0.0
      %236 = vmatpush1.msra.mxu0 %v39
      %237 = vmatprep.subr.mxu0 0.0
      %238 = vmatpush1.msra.mxu0 %v40
      %239 = vmatprep.subr.mxu0 0.0
      %240 = vmatpush1.msra.mxu0 0.0
      %241 = vmatprep.subr.mxu0 0.0
      %242 = vmatpush1.msra.mxu0 0.0
      %243 = vmatprep.subr.mxu0 0.0
      %244 = vmatpush1.msra.mxu0 0.0
      %245 = vmatprep.subr.mxu0 0.0
      %246 = vmatpush1.msra.mxu0 0.0
      %247 = vmatprep.subr.mxu0 0.0
      %248 = vmatpush1.msra.mxu0 0.0
      %249 = vmatprep.subr.mxu0 0.0
      %250 = vmatpush1.msra.mxu0 0.0
      %251 = vmatprep.subr.mxu0 0.0
      %252 = vmatpush1.msra.mxu0 0.0
      %253 = vmatprep.subr.mxu0 0.0
      %254 = vmatpush1.msra.mxu0 0.0
      %255 = vmatprep.subr.mxu0 0.0
      %256 = vmatpush1.msra.mxu0 0.0
      %257 = vmatprep.subr.mxu0 0.0
      %258 = vmatpush1.msra.mxu0 0.0
      %259 = vmatprep.subr.mxu0 0.0
      %260 = vmatpush1.msra.mxu0 0.0
      %261 = vmatprep.subr.mxu0 0.0
      %262 = vmatpush1.msra.mxu0 0.0
      %263 = vmatprep.subr.mxu0 0.0
      %264 = vmatpush1.msra.mxu0 0.0
      %265 = vmatprep.subr.mxu0 0.0
      %266 = vmatpush1.msra.mxu0 0.0
      %267 = vmatprep.subr.mxu0 0.0
      %268 = vmatpush1.msra.mxu0 0.0
      %269 = vmatprep.subr.mxu0 0.0
      %270 = vmatpush1.msra.mxu0 0.0
      %271 = vmatprep.subr.mxu0 0.0
      %272 = vmatpush1.msra.mxu0 0.0
      %273 = vmatprep.subr.mxu0 0.0
      %274 = vmatpush1.msra.mxu0 0.0
      %275 = vmatprep.subr.mxu0 0.0
      %276 = vmatpush1.msra.mxu0 0.0
      %277 = vmatprep.subr.mxu0 0.0
      %278 = vmatpush1.msra.mxu0 0.0
      %279 = vmatprep.subr.mxu0 0.0
      %280 = vmatpush1.msra.mxu0 0.0
      %281 = vmatprep.subr.mxu0 0.0
      %282 = vmatpush1.msra.mxu0 0.0
      %283 = vmatprep.subr.mxu0 0.0
      %284 = vmatpush1.msra.mxu0 0.0
      %285 = vmatprep.subr.mxu0 0.0
      %286 = vmatpush1.msra.mxu0 0.0
      %287 = vmatprep.subr.mxu0 0.0
      %288 = vmatpush1.msra.mxu0 0.0
      %289 = vmatprep.subr.mxu0 0.0
      %290 = vmatpush1.msra.mxu0 0.0
      %291 = vmatprep.subr.mxu0 0.0
      %292 = vmatpush1.msra.mxu0 0.0
      %293 = vmatprep.subr.mxu0 0.0
      %294 = vmatpush1.msra.mxu0 0.0
      %295 = vmatprep.mubr.f32.mxu0 0.0
      %296 = vmatmul.mubr.f32.gmra.mrb[0].mxu0 %v229
      %v297 = vpop.f32.mrb[0].mxu0
      %v298 = vadd.f32 0.0, %v297
      %v299 = vpop.f32.mrb[0].mxu0
      %300 = vdwg.mxu0
      %v301 = vadd.f32 %v225, %v298
      %v302 = vmul.f32 %v301, 0.5
      %v303 = vtanh.pop %v302
      %v304 = vmul.f32 %v303, 0.5
      %v305 = vadd.f32 %v304, 0.5
      %v306 = vtanh.pop %v301
      %v307 = vmul.f32 %v305, %v219
      %309 = vrot.lane.b32.xlu0 %v306, 32
      %v310 = vpop.permute.xlu0 %309
      %v312 = vmul.f32 %v305, %v310
      %314 = vrot.lane.b32.xlu0 %v312, 32
      %v315 = vpop.permute.xlu0 %314
      %v317 = vadd.f32 %v307, %v315
      %v318 = vtanh.pop %v317
      %320 = vrot.lane.b32.xlu0 %v318, 32
      %v321 = vpop.permute.xlu0 %320
      %v323 = vmul.f32 %v305, %v321
      %v324 = vsel %vm222, 1, 0
      %325 = vset.pattern.permute.xlu0 0
      %326 = vperm.xlu0 %325, %v324
      %v327 = vpop.permute.xlu0 %326
      %vm328 = vcmp.eq.s32.totalorder %v327, 1
      %v329 = vsel %vm328, %v323, %v217
      %v330 = vsel %vm328, %v317, %v219
      %332 = vrot.lane.b32.xlu0 %v323, 64
      %v333 = vpop.permute.xlu0 %332
      %336 = vrot.lane.b32.xlu0 %v218, 96
      %v337 = vpop.permute.xlu0 %336
      %v339 = vsel %vm73, %v333, %v337
      %vm340 = vcmask 523264
      %v342 = vsel %vm340, %v339, 0
      %344 = vmatprep.subr.mxu0 0.0
      %345 = vmatpush1.msra.mxu0 %v41
      %346 = vmatprep.subr.mxu0 0.0
      %347 = vmatpush1.msra.mxu0 %v42
      %348 = vmatprep.subr.mxu0 0.0
      %349 = vmatpush1.msra.mxu0 %v43
      %350 = vmatprep.subr.mxu0 0.0
      %351 = vmatpush1.msra.mxu0 %v44
      %352 = vmatprep.subr.mxu0 0.0
      %353 = vmatpush1.msra.mxu0 %v45
      %354 = vmatprep.subr.mxu0 0.0
      %355 = vmatpush1.msra.mxu0 %v46
      %356 = vmatprep.subr.mxu0 0.0
      %357 = vmatpush1.msra.mxu0 %v47
      %358 = vmatprep.subr.mxu0 0.0
      %359 = vmatpush1.msra.mxu0 %v48
      %360 = vmatprep.subr.mxu0 0.0
      %361 = vmatpush1.msra.mxu0 0.0
      %362 = vmatprep.subr.mxu0 0.0
      %363 = vmatpush1.msra.mxu0 0.0
      %364 = vmatprep.subr.mxu0 0.0
      %365 = vmatpush1.msra.mxu0 0.0
      %366 = vmatprep.subr.mxu0 0.0
      %367 = vmatpush1.msra.mxu0 0.0
      %368 = vmatprep.subr.mxu0 0.0
      %369 = vmatpush1.msra.mxu0 0.0
      %370 = vmatprep.subr.mxu0 0.0
      %371 = vmatpush1.msra.mxu0 0.0
      %372 = vmatprep.subr.mxu0 0.0
      %373 = vmatpush1.msra.mxu0 0.0
      %374 = vmatprep.subr.mxu0 0.0
      %375 = vmatpush1.msra.mxu0 0.0
      %376 = vmatprep.subr.mxu0 0.0
      %377 = vmatpush1.msra.mxu0 0.0
      %378 = vmatprep.subr.mxu0 0.0
      %379 = vmatpush1.msra.mxu0 0.0
      %380 = vmatprep.subr.mxu0 0.0
      %381 = vmatpush1.msra.mxu0 0.0
      %382 = vmatprep.subr.mxu0 0.0
      %383 = vmatpush1.msra.mxu0 0.0
      %384 = vmatprep.subr.mxu0 0.0
      %385 = vmatpush1.msra.mxu0 0.0
      %386 = vmatprep.subr.mxu0 0.0
      %387 = vmatpush1.msra.mxu0 0.0
      %388 = vmatprep.subr.mxu0 0.0
      %389 = vmatpush1.msra.mxu0 0.0
      %390 = vmatprep.subr.mxu0 0.0
      %391 = vmatpush1.msra.mxu0 0.0
      %392 = vmatprep.subr.mxu0 0.0
      %393 = vmatpush1.msra.mxu0 0.0
      %394 = vmatprep.subr.mxu0 0.0
      %395 = vmatpush1.msra.mxu0 0.0
      %396 = vmatprep.subr.mxu0 0.0
      %397 = vmatpush1.msra.mxu0 0.0
      %398 = vmatprep.subr.mxu0 0.0
      %399 = vmatpush1.msra.mxu0 0.0
      %400 = vmatprep.subr.mxu0 0.0
      %401 = vmatpush1.msra.mxu0 0.0
      %402 = vmatprep.subr.mxu0 0.0
      %403 = vmatpush1.msra.mxu0 0.0
      %404 = vmatprep.subr.mxu0 0.0
      %405 = vmatpush1.msra.mxu0 0.0
      %406 = vmatprep.subr.mxu0 0.0
      %407 = vmatpush1.msra.mxu0 0.0
      %408 = vmatprep.mubr.f32.mxu0 0.0
      %409 = vmatmul.mubr.f32.gmra.mrb[0].mxu0 %v342
      %v410 = vpop.f32.mrb[0].mxu0
      %v411 = vadd.f32 %v61, %v410
      %v412 = vpop.f32.mrb[0].mxu0
      %413 = vdwg.mxu0
      %v414 = vmul.f32 %v411, 0.5
      %v415 = vtanh.pop %v414
      %v416 = vmul.f32 %v415, 0.5
      %v417 = vadd.f32 %v416, 0.5
      %v418 = vtanh.pop %v411
      %v419 = vmul.f32 %v417, %v220
      %421 = vrot.lane.b32.xlu0 %v418, 32
      %v422 = vpop.permute.xlu0 %421
      %v424 = vmul.f32 %v417, %v422
      %426 = vrot.lane.b32.xlu0 %v424, 32
      %v427 = vpop.permute.xlu0 %426
      %v429 = vadd.f32 %v419, %v427
      %v430 = vtanh.pop %v429
      %432 = vrot.lane.b32.xlu0 %v430, 32
      %v433 = vpop.permute.xlu0 %432
      %v435 = vmul.f32 %v417, %v433
      %v436 = vsel %vm328, %v435, %v218
      %v437 = vsel %vm328, %v429, %v220
      %v438 = vsel %vm328, %v435, 0.0
      %440 = vrot.lane.b32.xlu0 %v438, 64
      %v441 = vpop.permute.xlu0 %440
      %s443 = scalar_lea.vmem [#allocation3], %s223
      %444 = vst.msk [vmem:[%s443] sm:$0xff] %vm73, %v441
    $region38: #{tpu_custom_call.1} parent=1 // loop_footer
      %s216 = sadd.s32 1, %s212
    $region39: #{tpu_custom_call.1} parent=1 // loop_footer_branch
      %211 = sbr.rel target = $region35
    $region40: #{tpu_custom_call.1} parent=1 // loop_exit
      _
    loop: start=0, step=1, limit=6
    $region41: #{tpu_custom_call.1} parent=1 // loop_pre_header
      _
    $region42: #{tpu_custom_call.1} parent=1 // loop_header
      %s446 = sphi 0, %s450
      %p447 = scmp.ge.s32.totalorder %s446, 6
      %v451 = vphi %v217, %v573
      %v452 = vphi %v218, %v679
      %v453 = vphi %v219, %v574
      %v454 = vphi %v220, %v680
      %v455 = vphi %v218, %v693
    $region43: #{tpu_custom_call.1} parent=1 // loop_header_branch
      %449 = sbr.rel (%p447) target = $region47
    $region44: #{tpu_custom_call.1} parent=1 // loop_body
      %s456 = smul.u32 %s446, 8
      %s457 = scalar_lea.vmem %s2, %s456
      %v458 = vld [vmem:[%s457] sm:$0xff]
      %vm459 = vcmp.gt.s32.totalorder %v458, 0
      %v460 = vstv %s446
      %vm461 = vcmp.gt.s32.totalorder %v64, %v460
      %vm462 = vmand %vm459, %vm461
      %464 = vrot.lane.b32.xlu0 %v455, 64
      %v465 = vpop.permute.xlu0 %464
      %468 = vrot.lane.b32.xlu0 %v451, 96
      %v469 = vpop.permute.xlu0 %468
      %v471 = vsel %vm73, %v465, %v469
      %vm472 = vcmask 523264
      %v474 = vsel %vm472, %v471, 0
      %476 = vmatprep.subr.mxu0 0.0
      %477 = vmatpush1.msra.mxu0 %v33
      %478 = vmatprep.subr.mxu0 0.0
      %479 = vmatpush1.msra.mxu0 %v34
      %480 = vmatprep.subr.mxu0 0.0
      %481 = vmatpush1.msra.mxu0 %v35
      %482 = vmatprep.subr.mxu0 0.0
      %483 = vmatpush1.msra.mxu0 %v36
      %484 = vmatprep.subr.mxu0 0.0
      %485 = vmatpush1.msra.mxu0 %v37
      %486 = vmatprep.subr.mxu0 0.0
      %487 = vmatpush1.msra.mxu0 %v38
      %488 = vmatprep.subr.mxu0 0.0
      %489 = vmatpush1.msra.mxu0 %v39
      %490 = vmatprep.subr.mxu0 0.0
      %491 = vmatpush1.msra.mxu0 %v40
      %492 = vmatprep.subr.mxu0 0.0
      %493 = vmatpush1.msra.mxu0 0.0
      %494 = vmatprep.subr.mxu0 0.0
      %495 = vmatpush1.msra.mxu0 0.0
      %496 = vmatprep.subr.mxu0 0.0
      %497 = vmatpush1.msra.mxu0 0.0
      %498 = vmatprep.subr.mxu0 0.0
      %499 = vmatpush1.msra.mxu0 0.0
      %500 = vmatprep.subr.mxu0 0.0
      %501 = vmatpush1.msra.mxu0 0.0
      %502 = vmatprep.subr.mxu0 0.0
      %503 = vmatpush1.msra.mxu0 0.0
      %504 = vmatprep.subr.mxu0 0.0
      %505 = vmatpush1.msra.mxu0 0.0
      %506 = vmatprep.subr.mxu0 0.0
      %507 = vmatpush1.msra.mxu0 0.0
      %508 = vmatprep.subr.mxu0 0.0
      %509 = vmatpush1.msra.mxu0 0.0
      %510 = vmatprep.subr.mxu0 0.0
      %511 = vmatpush1.msra.mxu0 0.0
      %512 = vmatprep.subr.mxu0 0.0
      %513 = vmatpush1.msra.mxu0 0.0
      %514 = vmatprep.subr.mxu0 0.0
      %515 = vmatpush1.msra.mxu0 0.0
      %516 = vmatprep.subr.mxu0 0.0
      %517 = vmatpush1.msra.mxu0 0.0
      %518 = vmatprep.subr.mxu0 0.0
      %519 = vmatpush1.msra.mxu0 0.0
      %520 = vmatprep.subr.mxu0 0.0
      %521 = vmatpush1.msra.mxu0 0.0
      %522 = vmatprep.subr.mxu0 0.0
      %523 = vmatpush1.msra.mxu0 0.0
      %524 = vmatprep.subr.mxu0 0.0
      %525 = vmatpush1.msra.mxu0 0.0
      %526 = vmatprep.subr.mxu0 0.0
      %527 = vmatpush1.msra.mxu0 0.0
      %528 = vmatprep.subr.mxu0 0.0
      %529 = vmatpush1.msra.mxu0 0.0
      %530 = vmatprep.subr.mxu0 0.0
      %531 = vmatpush1.msra.mxu0 0.0
      %532 = vmatprep.subr.mxu0 0.0
      %533 = vmatpush1.msra.mxu0 0.0
      %534 = vmatprep.subr.mxu0 0.0
      %535 = vmatpush1.msra.mxu0 0.0
      %536 = vmatprep.subr.mxu0 0.0
      %537 = vmatpush1.msra.mxu0 0.0
      %538 = vmatprep.subr.mxu0 0.0
      %539 = vmatpush1.msra.mxu0 0.0
      %540 = vmatprep.mubr.f32.mxu0 0.0
      %541 = vmatmul.mubr.f32.gmra.mrb[0].mxu0 %v474
      %v542 = vpop.f32.mrb[0].mxu0
      %v543 = vadd.f32 %v54, %v542
      %v544 = vpop.f32.mrb[0].mxu0
      %545 = vdwg.mxu0
      %v546 = vmul.f32 %v543, 0.5
      %v547 = vtanh.pop %v546
      %v548 = vmul.f32 %v547, 0.5
      %v549 = vadd.f32 %v548, 0.5
      %v550 = vtanh.pop %v543
      %v551 = vmul.f32 %v549, %v453
      %553 = vrot.lane.b32.xlu0 %v550, 32
      %v554 = vpop.permute.xlu0 %553
      %v556 = vmul.f32 %v549, %v554
      %558 = vrot.lane.b32.xlu0 %v556, 32
      %v559 = vpop.permute.xlu0 %558
      %v561 = vadd.f32 %v551, %v559
      %v562 = vtanh.pop %v561
      %564 = vrot.lane.b32.xlu0 %v562, 32
      %v565 = vpop.permute.xlu0 %564
      %v567 = vmul.f32 %v549, %v565
      %v568 = vsel %vm459, 1, 0
      %569 = vset.pattern.permute.xlu0 0
      %570 = vperm.xlu0 %569, %v568
      %v571 = vpop.permute.xlu0 %570
      %vm572 = vcmp.eq.s32.totalorder %v571, 1
      %v573 = vsel %vm572, %v567, %v451
      %v574 = vsel %vm572, %v561, %v453
      %576 = vrot.lane.b32.xlu0 %v567, 64
      %v577 = vpop.permute.xlu0 %576
      %580 = vrot.lane.b32.xlu0 %v452, 96
      %v581 = vpop.permute.xlu0 %580
      %v583 = vsel %vm73, %v577, %v581
      %v585 = vsel %vm472, %v583, 0
      %587 = vmatprep.subr.mxu0 0.0
      %588 = vmatpush1.msra.mxu0 %v41
      %589 = vmatprep.subr.mxu0 0.0
      %590 = vmatpush1.msra.mxu0 %v42
      %591 = vmatprep.subr.mxu0 0.0
      %592 = vmatpush1.msra.mxu0 %v43
      %593 = vmatprep.subr.mxu0 0.0
      %594 = vmatpush1.msra.mxu0 %v44
      %595 = vmatprep.subr.mxu0 0.0
      %596 = vmatpush1.msra.mxu0 %v45
      %597 = vmatprep.subr.mxu0 0.0
      %598 = vmatpush1.msra.mxu0 %v46
      %599 = vmatprep.subr.mxu0 0.0
      %600 = vmatpush1.msra.mxu0 %v47
      %601 = vmatprep.subr.mxu0 0.0
      %602 = vmatpush1.msra.mxu0 %v48
      %603 = vmatprep.subr.mxu0 0.0
      %604 = vmatpush1.msra.mxu0 0.0
      %605 = vmatprep.subr.mxu0 0.0
      %606 = vmatpush1.msra.mxu0 0.0
      %607 = vmatprep.subr.mxu0 0.0
      %608 = vmatpush1.msra.mxu0 0.0
      %609 = vmatprep.subr.mxu0 0.0
      %610 = vmatpush1.msra.mxu0 0.0
      %611 = vmatprep.subr.mxu0 0.0
      %612 = vmatpush1.msra.mxu0 0.0
      %613 = vmatprep.subr.mxu0 0.0
      %614 = vmatpush1.msra.mxu0 0.0
      %615 = vmatprep.subr.mxu0 0.0
      %616 = vmatpush1.msra.mxu0 0.0
      %617 = vmatprep.subr.mxu0 0.0
      %618 = vmatpush1.msra.mxu0 0.0
      %619 = vmatprep.subr.mxu0 0.0
      %620 = vmatpush1.msra.mxu0 0.0
      %621 = vmatprep.subr.mxu0 0.0
      %622 = vmatpush1.msra.mxu0 0.0
      %623 = vmatprep.subr.mxu0 0.0
      %624 = vmatpush1.msra.mxu0 0.0
      %625 = vmatprep.subr.mxu0 0.0
      %626 = vmatpush1.msra.mxu0 0.0
      %627 = vmatprep.subr.mxu0 0.0
      %628 = vmatpush1.msra.mxu0 0.0
      %629 = vmatprep.subr.mxu0 0.0
      %630 = vmatpush1.msra.mxu0 0.0
      %631 = vmatprep.subr.mxu0 0.0
      %632 = vmatpush1.msra.mxu0 0.0
      %633 = vmatprep.subr.mxu0 0.0
      %634 = vmatpush1.msra.mxu0 0.0
      %635 = vmatprep.subr.mxu0 0.0
      %636 = vmatpush1.msra.mxu0 0.0
      %637 = vmatprep.subr.mxu0 0.0
      %638 = vmatpush1.msra.mxu0 0.0
      %639 = vmatprep.subr.mxu0 0.0
      %640 = vmatpush1.msra.mxu0 0.0
      %641 = vmatprep.subr.mxu0 0.0
      %642 = vmatpush1.msra.mxu0 0.0
      %643 = vmatprep.subr.mxu0 0.0
      %644 = vmatpush1.msra.mxu0 0.0
      %645 = vmatprep.subr.mxu0 0.0
      %646 = vmatpush1.msra.mxu0 0.0
      %647 = vmatprep.subr.mxu0 0.0
      %648 = vmatpush1.msra.mxu0 0.0
      %649 = vmatprep.subr.mxu0 0.0
      %650 = vmatpush1.msra.mxu0 0.0
      %651 = vmatprep.mubr.f32.mxu0 0.0
      %652 = vmatmul.mubr.f32.gmra.mrb[0].mxu0 %v585
      %v653 = vpop.f32.mrb[0].mxu0
      %v654 = vadd.f32 %v61, %v653
      %v655 = vpop.f32.mrb[0].mxu0
      %656 = vdwg.mxu0
      %v657 = vmul.f32 %v654, 0.5
      %v658 = vtanh.pop %v657
      %v659 = vmul.f32 %v658, 0.5
      %v660 = vadd.f32 %v659, 0.5
      %v661 = vtanh.pop %v654
      %v662 = vmul.f32 %v660, %v454
      %664 = vrot.lane.b32.xlu0 %v661, 32
      %v665 = vpop.permute.xlu0 %664
      %v667 = vmul.f32 %v660, %v665
      %669 = vrot.lane.b32.xlu0 %v667, 32
      %v670 = vpop.permute.xlu0 %669
      %v672 = vadd.f32 %v662, %v670
      %v673 = vtanh.pop %v672
      %675 = vrot.lane.b32.xlu0 %v673, 32
      %v676 = vpop.permute.xlu0 %675
      %v678 = vmul.f32 %v660, %v676
      %v679 = vsel %vm572, %v678, %v452
      %v680 = vsel %vm572, %v672, %v454
      %v681 = vsel %vm462, 1, 0
      %682 = vset.pattern.permute.xlu0 0
      %683 = vperm.xlu0 %682, %v681
      %v684 = vpop.permute.xlu0 %683
      %vm685 = vcmp.eq.s32.totalorder %v684, 1
      %v686 = vsel %vm685, %v678, 0.0
      %688 = vrot.lane.b32.xlu0 %v686, 64
      %v689 = vpop.permute.xlu0 %688
      %s691 = scalar_lea.vmem [#allocation5], %s456
      %692 = vst.msk [vmem:[%s691] sm:$0xff] %vm73, %v689
      %v693 = vsel %vm572, %v678, 0.0
    $region45: #{tpu_custom_call.1} parent=1 // loop_footer
      %s450 = sadd.s32 1, %s446
    $region46: #{tpu_custom_call.1} parent=1 // loop_footer_branch
      %445 = sbr.rel target = $region42
    $region47: #{tpu_custom_call.1} parent=1 // loop_exit
      _
    // Predicated region
    $region48: #{tpu_custom_call.1} parent=1 // pred_check
      _
    $region49: #{tpu_custom_call.1} parent=1 // pred_check_branch
      %695 = sbr.rel (0) target = $region51
    $region50: #{tpu_custom_call.1} parent=1 // pred_region
      %s697 = ssub.s32 1024, 1024
      %698 = vsyncadd [#allocation4], %s697
      %s699 = sshll.u32 [#allocation3], 4
      %s700 = int_to_ptr.vmem [resolvable:$true] %s699
      %705 = dma.vmem_to_hbm [thread:$0]  %s700, 1024, %s8, [#allocation4], 128, 128, 8
    $region51: #{tpu_custom_call.1} parent=1 // pred_fallthru
      _
    // Predicated region
    $region52: #{tpu_custom_call.1} parent=1 // pred_check
      _
    $region53: #{tpu_custom_call.1} parent=1 // pred_check_branch
      %707 = sbr.rel (0) target = $region55
    $region54: #{tpu_custom_call.1} parent=1 // pred_region
      %s709 = ssub.s32 768, 768
      %710 = vsyncadd [#allocation6], %s709
      %s711 = sshll.u32 [#allocation5], 4
      %s712 = int_to_ptr.vmem [resolvable:$true] %s711
      %717 = dma.vmem_to_hbm [thread:$0]  %s712, 768, %s9, [#allocation6], 128, 128, 8
    $region55: #{tpu_custom_call.1} parent=1 // pred_fallthru
      _
    // Predicated region
    $region56: #{tpu_custom_call.1} parent=1 // pred_check
      _
    $region57: #{tpu_custom_call.1} parent=1 // pred_check_branch
      %719 = sbr.rel (0) target = $region59
    $region58: #{tpu_custom_call.1} parent=1 // pred_region
      %720 = dma.done [#allocation4], 1024
    $region59: #{tpu_custom_call.1} parent=1 // pred_fallthru
      _
    // Predicated region
    $region60: #{tpu_custom_call.1} parent=1 // pred_check
      _
    $region61: #{tpu_custom_call.1} parent=1 // pred_check_branch
      %722 = sbr.rel (0) target = $region63
    $region62: #{tpu_custom_call.1} parent=1 // pred_region
      %723 = dma.done [#allocation6], 768
    $region63: #{tpu_custom_call.1} parent=1 // pred_fallthru
      _
    %724 = vsyncpa [#allocation4], 1
    %725 = vsyncpa [#allocation6], 1

</llo_original>
